<compile_context>
chip_gen: v7x
topology: tpu7x:2x2x1
jax: 0.10.0
libtpu: 0.0.40
codegen_flags: <defaults>
</compile_context>

<pallas_src>
import functools

import numpy as np
import jax
import jax.numpy as jnp
from jax.experimental import pallas as pl
from jax.experimental.pallas import tpu as pltpu

NEG = 0.01      # LeakyReLU negative slope
BN_EPS = 1e-5   # BatchNorm eps

# Set to jnp.bfloat16 on v6e/v7x for ~2x MXU/DMA throughput (relax the test tolerance then).
MXU_IN_DTYPE = jnp.float32


def _leaky_relu(v):
    return jnp.where(v >= 0, v, NEG * v)


def _pick_tile(n, target=256):
    """Largest divisor of n that is a multiple of 8 and <= target, else n (full)."""
    if n <= target:
        return n
    for t in range(target - (target % 8), 7, -8):
        if n % t == 0:
            return t
    return n


# --------------------------------------------------------------------------
# Kernel 1: pairwise squared distances (Gram-matrix form on the MXU)
#   dist[b, i, j] = ||x_i||^2 + ||x_j||^2 - 2 x_i.x_j   (clamped at 0, diag masked to 1e9)
# --------------------------------------------------------------------------
def _pdist_kernel(xi_ref, xj_ref, sqj_ref, d_ref, *, TN, N):
    xi = xi_ref[0]                                   # [TN, Fin]  row tile
    xj = xj_ref[0]                                   # [N, Fin]   all points
    gram = jax.lax.dot_general(xi, xj, (((1,), (1,)), ((), ())),
                               preferred_element_type=jnp.float32)     # [TN, N]
    sq_i = jnp.sum(xi * xi, axis=1, keepdims=True)                     # [TN, 1]
    d = sq_i + sqj_ref[0] - 2.0 * gram
    d = jnp.maximum(d, 0.0)                          # guard cancellation before top_k
    row0 = pl.program_id(1) * TN
    rows = row0 + jax.lax.broadcasted_iota(jnp.int32, (TN, N), 0)
    cols = jax.lax.broadcasted_iota(jnp.int32, (TN, N), 1)
    d_ref[0] = jnp.where(rows == cols, jnp.float32(1e9), d)            # exclude self


def pairwise_sqdist(x_bnf, *, tile_n=256):
    B, N, Fin = x_bnf.shape
    TN = _pick_tile(N, tile_n)
    sqj = jnp.sum(x_bnf * x_bnf, axis=-1)[:, None, :]                  # [B, 1, N]
    kern = functools.partial(_pdist_kernel, TN=TN, N=N)
    cost = pl.CostEstimate(flops=2 * B * N * N * Fin, transcendentals=0,
                           bytes_accessed=4 * (2 * B * N * Fin + B * N + B * N * N))
    return pl.pallas_call(
        kern,
        out_shape=jax.ShapeDtypeStruct((B, N, N), jnp.float32),
        grid=(B, N // TN),
        in_specs=[
            pl.BlockSpec((1, TN, Fin), lambda b, i: (b, i, 0)),
            pl.BlockSpec((1, N, Fin), lambda b, i: (b, 0, 0)),
            pl.BlockSpec((1, 1, N), lambda b, i: (b, 0, 0)),
        ],
        out_specs=pl.BlockSpec((1, TN, N), lambda b, i: (b, i, 0)),
        compiler_params=pltpu.CompilerParams(
            dimension_semantics=("parallel", "parallel"),
            vmem_limit_bytes=48 * 1024 * 1024),
        cost_estimate=cost,
    )(x_bnf, x_bnf, sqj)


# --------------------------------------------------------------------------
# Kernel 2: fused EdgeBlock hot path (1x1 convs, softmax over k, [1,k] conv_out)
#   per grid cell (b, i): an N-tile of TN points with their k neighbors.
# --------------------------------------------------------------------------
def _edge_block_kernel(xc_ref, nbr_ref, wcat_ref, b1_ref, w2_ref, b2_ref,
                       wxc_ref, bx_ref, wo_ref, bo_ref, out_ref,
                       *, TN, k, Fin, Fh, Fout, lane_dense_out):
    xc = xc_ref[0]                                   # [TN, Fin]     central points
    nbr3 = nbr_ref[0]                                # [TN, k, Fin]  k nearest neighbors
    diff3 = nbr3 - xc[:, None, :]                    # neighbor - central
    diff2 = diff3.reshape(TN * k, Fin)               # minor dim unchanged -> cheap reshape

    # One MXU pass over the difference features feeds both branches:
    # packed weight = [w1 (conv_w layer 1) | wx_diff (diff half of conv_x)].
    hw = jnp.dot(diff2.astype(MXU_IN_DTYPE), wcat_ref[...].astype(MXU_IN_DTYPE),
                 preferred_element_type=jnp.float32)          # [TN*k, Fh + Fout]
    h1 = _leaky_relu(hw[:, :Fh] + b1_ref[...])                # conv_w layer 1
    yd3 = hw[:, Fh:].reshape(TN, k, Fout)                     # conv_x, diff half (pre-act)

    # conv_w layer 2.
    h2 = _leaky_relu(
        jnp.dot(h1.astype(MXU_IN_DTYPE), w2_ref[...].astype(MXU_IN_DTYPE),
                preferred_element_type=jnp.float32) + b2_ref[...])     # [TN*k, Fout]
    h3 = h2.reshape(TN, k, Fout)                              # attention logits

    # conv_x central half: computed once per point, broadcast over the k neighbors.
    yc = jnp.dot(xc.astype(MXU_IN_DTYPE), wxc_ref[...].astype(MXU_IN_DTYPE),
                 preferred_element_type=jnp.float32) + bx_ref[...]      # [TN, Fout]
    y3 = _leaky_relu(yd3 + yc[:, None, :])                    # [TN, k, Fout]

    # Softmax over the k neighbors (PyTorch softmax(dim=-1) on [B, Fout, N, k]).
    m = jnp.max(h3, axis=1, keepdims=True)
    e = jnp.exp(h3 - m)
    inv = pl.reciprocal(jnp.sum(e, axis=1, keepdims=True), approx=True)   # EUP slot
    z3 = y3 * (e * inv)                                       # [TN, k, Fout]

    # conv_out ([1, k] kernel): k accumulated MXU contractions with a single accumulator.
    wo = wo_ref[...].astype(MXU_IN_DTYPE)                     # [k, Fout, Fout]
    acc = jnp.zeros((TN, Fout), jnp.float32)
    for j in range(k):                                        # static unroll, small k
        acc = acc + jnp.dot(z3[:, j, :].astype(MXU_IN_DTYPE), wo[j],
                            preferred_element_type=jnp.float32)
    res = acc + bo_ref[...]                                   # [TN, Fout]

    if lane_dense_out:
        # Write the PyTorch layout [Fout, TN] directly; XLU transpose rides a free slot and
        # the store is lane-dense on the (large) N axis instead of the narrow Fout axis.
        out_ref[0] = jnp.transpose(res)                       # [Fout, TN]
    else:
        out_ref[0] = res                                      # [TN, Fout]


def edge_block_forward(x, params, k, *, tile_n=256):
    """x: [B, Fin, N] (PyTorch layout). Returns [B, Fout, N]."""
    B, Fin, N = x.shape
    Fh = params["w1"].shape[1]
    Fout = params["wx"].shape[1]
    x_bnf = jnp.transpose(x, (0, 2, 1)).astype(jnp.float32)         # [B, N, Fin]

    # kNN graph: Gram-form distances in Pallas; top-k selection + gather stay in XLA glue.
    dist = pairwise_sqdist(x_bnf, tile_n=tile_n)                    # [B, N, N] (self masked)
    _, idx = jax.lax.top_k(-dist, k)                                # [B, N, k]
    nbr = jax.vmap(lambda xb, ib: xb[ib])(x_bnf, idx)               # [B, N, k, Fin]

    # Pack weights: one matmul over (nbr - central) serves both conv_w layer-1 and the
    # difference half of conv_x; the central half of conv_x is applied per point.
    wcat = jnp.concatenate([params["w1"], params["wx"][Fin:]], axis=1)   # [Fin, Fh+Fout]
    wxc = params["wx"][:Fin]                                             # [Fin, Fout]

    TN = _pick_tile(N, tile_n)
    grid = (B, N // TN)

    # Lane-dense [B, Fout, N] output needs the N-tile to satisfy the (8,128) block rule on the
    # lane axis; otherwise fall back to [B, N, Fout] + a (tiny) XLA transpose.
    lane_dense = (TN == N) or (TN % 128 == 0)
    kern = functools.partial(_edge_block_kernel, TN=TN, k=k, Fin=Fin, Fh=Fh, Fout=Fout,
                             lane_dense_out=lane_dense)

    flops = 2 * B * N * k * (Fin * (Fh + Fout) + Fh * Fout + Fout * Fout) \
        + 2 * B * N * Fin * Fout
    bytes_accessed = 4 * (B * N * k * Fin + B * N * Fin + B * N * Fout
                          + Fin * (Fh + Fout) + Fh * Fout + Fin * Fout + k * Fout * Fout)
    cost = pl.CostEstimate(flops=flops, transcendentals=B * N * k * Fout,
                           bytes_accessed=bytes_accessed)

    if lane_dense:
        out_shape = jax.ShapeDtypeStruct((B, Fout, N), jnp.float32)
        out_spec = pl.BlockSpec((1, Fout, TN), lambda b, i: (b, 0, i))
    else:
        out_shape = jax.ShapeDtypeStruct((B, N, Fout), jnp.float32)
        out_spec = pl.BlockSpec((1, TN, Fout), lambda b, i: (b, i, 0))

    out = pl.pallas_call(
        kern,
        out_shape=out_shape,
        grid=grid,
        in_specs=[
            pl.BlockSpec((1, TN, Fin), lambda b, i: (b, i, 0)),          # central points
            pl.BlockSpec((1, TN, k, Fin), lambda b, i: (b, i, 0, 0)),    # gathered neighbors
            pl.BlockSpec((Fin, Fh + Fout), lambda b, i: (0, 0)),         # packed [w1 | wx_d]
            pl.BlockSpec((1, Fh), lambda b, i: (0, 0)),                  # b1
            pl.BlockSpec((Fh, Fout), lambda b, i: (0, 0)),               # w2
            pl.BlockSpec((1, Fout), lambda b, i: (0, 0)),                # b2
            pl.BlockSpec((Fin, Fout), lambda b, i: (0, 0)),              # wx (central half)
            pl.BlockSpec((1, Fout), lambda b, i: (0, 0)),                # bx
            pl.BlockSpec((k, Fout, Fout), lambda b, i: (0, 0, 0)),       # wo
            pl.BlockSpec((1, Fout), lambda b, i: (0, 0)),                # bo
        ],
        out_specs=out_spec,
        compiler_params=pltpu.CompilerParams(
            dimension_semantics=("parallel", "parallel"),
            vmem_limit_bytes=48 * 1024 * 1024),
        cost_estimate=cost,
    )(x_bnf, nbr, wcat, params["b1"], params["w2"], params["b2"],
      wxc, params["bx"], params["wo"], params["bo"])

    if lane_dense:
        return out                                                      # [B, Fout, N]
    return jnp.transpose(out, (0, 2, 1))                                # [B, Fout, N]


# --------------------------------------------------------------------------
# Deterministic synthetic parameters (Conv2d + folded eval-mode BatchNorm)
# --------------------------------------------------------------------------
def init_params(key, Fin, Fout, k):
    Fh = Fout // 2
    ks = jax.random.split(key, 7)

    def conv_wb(kk, cin, cout, kw=1):
        kw_, kb_ = jax.random.split(kk)
        bound = 1.0 / np.sqrt(cin * kw)
        w = jax.random.uniform(kw_, (cout, cin, 1, kw), jnp.float32, -bound, bound)
        b = jax.random.uniform(kb_, (cout,), jnp.float32, -bound, bound)
        return w, b

    def bn_params(kk, c):
        k1, k2, k3, k4 = jax.random.split(kk, 4)
        gamma = jax.random.uniform(k1, (c,), jnp.float32, 0.5, 1.5)
        beta = jax.random.uniform(k2, (c,), jnp.float32, -0.5, 0.5)
        mean = jax.random.uniform(k3, (c,), jnp.float32, -0.5, 0.5)
        var = jax.random.uniform(k4, (c,), jnp.float32, 0.5, 1.5)
        return gamma, beta, mean, var

    def fold_bn(w, b, gamma, beta, mean, var):
        scale = gamma / jnp.sqrt(var + BN_EPS)
        return w * scale[:, None, None, None], (b - mean) * scale + beta

    w1, b1 = fold_bn(*conv_wb(ks[0], Fin, Fh), *bn_params(ks[1], Fh))
    w2, b2 = fold_bn(*conv_wb(ks[2], Fh, Fout), *bn_params(ks[3], Fout))
    wx, bx = fold_bn(*conv_wb(ks[4], 2 * Fin, Fout), *bn_params(ks[5], Fout))
    wo, bo = conv_wb(ks[6], Fout, Fout, kw=k)

    return {
        "w1": jnp.transpose(w1[:, :, 0, 0], (1, 0)),             # [Fin, Fh]
        "b1": b1[None, :],                                       # [1, Fh]
        "w2": jnp.transpose(w2[:, :, 0, 0], (1, 0)),             # [Fh, Fout]
        "b2": b2[None, :],                                       # [1, Fout]
        "wx": jnp.transpose(wx[:, :, 0, 0], (1, 0)),             # [2Fin, Fout]
        "bx": bx[None, :],                                       # [1, Fout]
        "wo": jnp.transpose(wo[:, :, 0, :], (2, 1, 0)),          # [k, Fout(in), Fout(out)]
        "bo": bo[None, :],                                       # [1, Fout]
    }


# --------------------------------------------------------------------------
# Pure-JAX reference (same math) for verification
# --------------------------------------------------------------------------
def reference_forward(x, params, k):
    B, Fin, N = x.shape
    hi = jax.lax.Precision.HIGHEST
    xb = jnp.transpose(x, (0, 2, 1)).astype(jnp.float32)
    diff = xb[:, :, None, :] - xb[:, None, :, :]
    dist = jnp.sum(diff * diff, axis=-1) + jnp.eye(N, dtype=jnp.float32)[None] * 1e9
    _, idx = jax.lax.top_k(-dist, k)
    nbr = jax.vmap(lambda a, i: a[i])(xb, idx)
    central = jnp.broadcast_to(xb[:, :, None, :], nbr.shape)
    e = jnp.concatenate([central, nbr - central], axis=-1)       # [B, N, k, 2Fin]

    dot = lambda a, b: jnp.matmul(a, b, precision=hi)
    h = _leaky_relu(dot(e[..., Fin:], params["w1"]) + params["b1"])
    h = _leaky_relu(dot(h, params["w2"]) + params["b2"])
    w = jax.nn.softmax(h, axis=2)                                # softmax over k
    y = _leaky_relu(dot(e, params["wx"]) + params["bx"])
    z = y * w                                                    # [B, N, k, Fout]
    out = jnp.einsum("bnjf,jfo->bno", z, params["wo"], precision=hi) + params["bo"]
    return jnp.transpose(out, (0, 2, 1))


if __name__ == "__main__":
    B, Fin, N, k, Fout = 2, 4, 16, 8, 32
    root = jax.random.PRNGKey(0)
    kx, kp = jax.random.split(root)
    x = jax.random.normal(kx, (B, Fin, N), jnp.float32)
    params = init_params(kp, Fin, Fout, k)

    out = jax.block_until_ready(edge_block_forward(x, params, k))
    assert out.shape == (B, Fout, N) and out.dtype == jnp.float32

    ref = reference_forward(x, params, k)
    # 2e-3: headroom for the EUP approximate reciprocal used in the softmax denominator.
    np.testing.assert_allclose(np.asarray(out), np.asarray(ref), atol=2e-3, rtol=2e-3)
    print("KERNEL_OK")
</pallas_src>

<mosaic_0001>
module attributes {stable_mosaic.version = 11 : i64} {
  func.func @_pdist_kernel(%arg0: i32, %arg1: i32, %arg2: memref<1x16x4xf32, #tpu.memory_space<vmem>>, %arg3: memref<1x16x4xf32, #tpu.memory_space<vmem>>, %arg4: memref<1x1x16xf32, #tpu.memory_space<vmem>>, %arg5: memref<1x16x16xf32, #tpu.memory_space<vmem>>) attributes {dimension_semantics = [#tpu.dimension_semantics<parallel>, #tpu.dimension_semantics<parallel>], iteration_bounds = array<i64: 2, 1>, scalar_prefetch = 0 : i64, scratch_operands = 0 : i64, tpu.core_type = #tpu.core_type<tc>, window_params = [{transform_indices = @transform_0, window_bounds = array<i64: 1, 16, 4>}, {transform_indices = @transform_1, window_bounds = array<i64: 1, 16, 4>}, {transform_indices = @transform_2, window_bounds = array<i64: 1, 1, 16>}, {transform_indices = @transform_3, window_bounds = array<i64: 1, 16, 16>}]} {
    %c0 = arith.constant 0 : index
    %c0_0 = arith.constant 0 : index
    %c0_1 = arith.constant 0 : index
    %0 = vector.load %arg2[%c0, %c0_0, %c0_1] : memref<1x16x4xf32, #tpu.memory_space<vmem>>, vector<1x16x4xf32>
    %1 = vector.shape_cast %0 : vector<1x16x4xf32> to vector<16x4xf32>
    %c0_2 = arith.constant 0 : index
    %c0_3 = arith.constant 0 : index
    %c0_4 = arith.constant 0 : index
    %2 = vector.load %arg3[%c0_2, %c0_3, %c0_4] : memref<1x16x4xf32, #tpu.memory_space<vmem>>, vector<1x16x4xf32>
    %3 = vector.shape_cast %2 : vector<1x16x4xf32> to vector<16x4xf32>
    %cst = arith.constant dense<0.000000e+00> : vector<16x16xf32>
    %4 = tpu.matmul %1, %3, %cst {dimension_numbers = #tpu.dot_dimension_numbers<[1], [1], [0], [0], [0, 0, 1, 0], [], []>} : vector<16x4xf32>, vector<16x4xf32>, vector<16x16xf32> -> vector<16x16xf32>
    %5 = arith.mulf %1, %1 : vector<16x4xf32>
    %cst_5 = arith.constant dense<0.000000e+00> : vector<16xf32>
    %6 = vector.multi_reduction <add>, %5, %cst_5 [1] : vector<16x4xf32> to vector<16xf32>
    %7 = vector.shape_cast %6 : vector<16xf32> to vector<16x1xf32>
    %c0_6 = arith.constant 0 : index
    %c0_7 = arith.constant 0 : index
    %c0_8 = arith.constant 0 : index
    %8 = vector.load %arg4[%c0_6, %c0_7, %c0_8] : memref<1x1x16xf32, #tpu.memory_space<vmem>>, vector<1x1x16xf32>
    %9 = vector.shape_cast %8 : vector<1x1x16xf32> to vector<1x16xf32>
    %10 = vector.broadcast %7 : vector<16x1xf32> to vector<16x16xf32>
    %11 = vector.broadcast %9 : vector<1x16xf32> to vector<16x16xf32>
    %12 = arith.addf %10, %11 : vector<16x16xf32>
    %cst_9 = arith.constant 2.000000e+00 : f32
    %13 = vector.broadcast %cst_9 : f32 to vector<16x16xf32>
    %14 = arith.mulf %13, %4 : vector<16x16xf32>
    %15 = arith.subf %12, %14 : vector<16x16xf32>
    %cst_10 = arith.constant 0.000000e+00 : f32
    %16 = vector.broadcast %cst_10 : f32 to vector<16x16xf32>
    %17 = arith.maximumf %15, %16 : vector<16x16xf32>
    %c16_i32 = arith.constant 16 : i32
    %18 = arith.muli %arg1, %c16_i32 : i32
    %19 = tpu.iota {dimensions = array<i32: 0>} : vector<16x16xi32>
    %20 = vector.broadcast %18 : i32 to vector<16x16xi32>
    %21 = arith.addi %20, %19 : vector<16x16xi32>
    %22 = tpu.iota {dimensions = array<i32: 1>} : vector<16x16xi32>
    %23 = arith.cmpi eq, %21, %22 : vector<16x16xi32>
    %cst_11 = arith.constant 1.000000e+09 : f32
    %24 = vector.broadcast %cst_11 : f32 to vector<16x16xf32>
    %25 = arith.select %23, %24, %17 : vector<16x16xi1>, vector<16x16xf32>
    %c0_12 = arith.constant 0 : index
    %c0_13 = arith.constant 0 : index
    %c0_14 = arith.constant 0 : index
    %26 = vector.load %arg5[%c0_12, %c0_13, %c0_14] : memref<1x16x16xf32, #tpu.memory_space<vmem>>, vector<1x16x16xf32>
    %27 = vector.shape_cast %26 : vector<1x16x16xf32> to vector<16x16xf32>
    %28 = vector.shape_cast %25 : vector<16x16xf32> to vector<1x16x16xf32>
    tpu.vector_store %arg5[%c0_12, %c0_13, %c0_14], %28 {strides = array<i32>} : memref<1x16x16xf32, #tpu.memory_space<vmem>>, vector<1x16x16xf32>,
    return
  }
  func.func @transform_0(%arg0: i32, %arg1: i32) -> (i32, i32, i32) {
    %c0_i32 = arith.constant 0 : i32
    %c0_i32_0 = arith.constant 0 : i32
    return %arg0, %arg1, %c0_i32 : i32, i32, i32
  }
  func.func @transform_1(%arg0: i32, %arg1: i32) -> (i32, i32, i32) {
    %c0_i32 = arith.constant 0 : i32
    %c0_i32_0 = arith.constant 0 : i32
    %c0_i32_1 = arith.constant 0 : i32
    return %arg0, %c0_i32, %c0_i32_0 : i32, i32, i32
  }
  func.func @transform_2(%arg0: i32, %arg1: i32) -> (i32, i32, i32) {
    %c0_i32 = arith.constant 0 : i32
    %c0_i32_0 = arith.constant 0 : i32
    %c0_i32_1 = arith.constant 0 : i32
    return %arg0, %c0_i32, %c0_i32_0 : i32, i32, i32
  }
  func.func @transform_3(%arg0: i32, %arg1: i32) -> (i32, i32, i32) {
    %c0_i32 = arith.constant 0 : i32
    %c0_i32_0 = arith.constant 0 : i32
    return %arg0, %arg1, %c0_i32 : i32, i32, i32
  }
}

</mosaic_0001>

<llo_original>
// kernel: tpu_custom_call.1
$region0: #{tpu_custom_call.1}
  #allocation0 [shape = 'u32[]', space=smem, size = 0x4, offset = 0x4, fixed_abs, tag = 'smem constant byte address 0x4 - core index']
  #allocation1 [shape = 'u32[144,128]{1,0:T(1,128)}', space=vmem, size = 0x12000, scoped, tag = 'internal scratch']
  %s0 = inlined_call_operand.vmem [shape: f32[2,16,4], index: 0, kind: input, shape index: {}]
  %s1 = inlined_call_operand.vmem [shape: f32[2,16,4], index: 1, kind: input, shape index: {}]
  %s2 = inlined_call_operand.vmem [shape: f32[2,1,16], index: 2, kind: input, shape index: {}]
  %s3 = inlined_call_operand.hbm [shape: f32[2,16,16], index: 3, kind: output, shape index: {}]
  %s4 = sld [smem:[#allocation0]]
  $region45: #{tpu_custom_call.1} parent=0
    _
  %s6 = ssub.s32 1, %s4
  %s7 = scalar_select 0, %s6, %s4
  $region1: #{tpu_custom_call.1} parent=0
    #allocation2 [shape = 'u8[16384]{0}', space=vmem, size = 0x4000, scoped, tag = 'output window, operand 0']
    #allocation3 [shape = 's32[2]{0}', space=sflag, size = 0x8, scoped, tag = 'scoped memory for tpu_custom_call.1']
    %8 = vsyncpa [#allocation3], 0
    %s9 = scalar_lea.sflag [#allocation3], 1
    %10 = vsyncpa %s9, 0
    loop: start=0, step=1, limit=4
    $region2: #{tpu_custom_call.1} parent=1 // loop_pre_header
      _
    $region3: #{tpu_custom_call.1} parent=1 // loop_header
      %s12 = sphi 0, %s16
      %p13 = scmp.ge.s32.totalorder %s12, 4
      %s19 = sphi 0, %s31
      %s20 = sphi 0, %s27
      %s21 = sphi 0, %s19
      %s22 = sphi 0, %s20
      %s23 = sphi 0, %s21
      %s24 = sphi 0, %s22
      %s36 = sphi 0, %s38
      %s39 = sphi 0, %s36
      %s40 = sphi 0, %s39
      %s56 = sphi 0, %s40
      %s62 = sphi 0, %s64
      %s65 = sphi 0, %s62
      %s66 = sphi 0, %s65
      %s82 = sphi 0, %s66
      %s88 = sphi 0, %s90
      %s91 = sphi 0, %s88
      %s92 = sphi 0, %s91
      %s108 = sphi 0, %s92
      %s116 = sphi 0, %s118
      %s119 = sphi 0, %s116
      %s120 = sphi 0, %s119
      %s136 = sphi 0, %s120
    $region4: #{tpu_custom_call.1} parent=1 // loop_header_branch
      %15 = sbr.rel (%p13) target = $region8
    $region5: #{tpu_custom_call.1} parent=1 // loop_body
      %s17 = ssub.s32 %s12, 1
      %s18 = ssub.s32 %s12, 2
      %s25 = sadd.s32 1, %s20
      %p26 = scmp.ge.s32.totalorder %s25, 1
      %s27 = scalar_select %p26, 0, %s25
      %s28 = sadd.s32 1, %s19
      %s29 = scalar_select %p26, %s28, %s19
      %p30 = scmp.ge.s32.totalorder %s29, 2
      %s31 = scalar_select %p30, 0, %s29
      %s32 = ssub.s32 %s19, %s31
      %s33 = ssub.s32 %s20, %s27
      %s34 = sor.u32 %s32, %s33
      %p35 = scmp.eq.s32.totalorder %s34, 0
      %s37 = sadd.s32 %s36, 1
      %s38 = scalar_select %p35, %s36, %s37
      %p41 = pneg %p35
      %p42 = scmp.eq.s32.totalorder %s12, 1
      %p43 = por %p41, %p42
      %p44 = scmp.ne.s32.totalorder %s36, %s39
      %p45 = scmp.eq.s32.totalorder %s12, 0
      %p46 = por %p44, %p45
      %p47 = scmp.ne.s32.totalorder %s36, %s39
      %p48 = scmp.eq.s32.totalorder %s17, 1
      %p49 = por %p47, %p48
      %p50 = scmp.ne.s32.totalorder %s39, %s40
      %p51 = scmp.eq.s32.totalorder %s17, 0
      %p52 = por %p50, %p51
      %p53 = scmp.ne.s32.totalorder %s39, %s40
      %p54 = scmp.eq.s32.totalorder %s18, 1
      %p55 = por %p53, %p54
      %p57 = scmp.ne.s32.totalorder %s40, %s56
      %p58 = scmp.eq.s32.totalorder %s18, 0
      %p59 = por %p57, %p58
      %s60 = ssub.s32 %s19, %s31
      %p61 = scmp.eq.s32.totalorder %s60, 0
      %s63 = sadd.s32 %s62, 1
      %s64 = scalar_select %p61, %s62, %s63
      %p67 = pneg %p61
      %p68 = scmp.eq.s32.totalorder %s12, 1
      %p69 = por %p67, %p68
      %p70 = scmp.ne.s32.totalorder %s62, %s65
      %p71 = scmp.eq.s32.totalorder %s12, 0
      %p72 = por %p70, %p71
      %p73 = scmp.ne.s32.totalorder %s62, %s65
      %p74 = scmp.eq.s32.totalorder %s17, 1
      %p75 = por %p73, %p74
      %p76 = scmp.ne.s32.totalorder %s65, %s66
      %p77 = scmp.eq.s32.totalorder %s17, 0
      %p78 = por %p76, %p77
      %p79 = scmp.ne.s32.totalorder %s65, %s66
      %p80 = scmp.eq.s32.totalorder %s18, 1
      %p81 = por %p79, %p80
      %p83 = scmp.ne.s32.totalorder %s66, %s82
      %p84 = scmp.eq.s32.totalorder %s18, 0
      %p85 = por %p83, %p84
      %s86 = ssub.s32 %s19, %s31
      %p87 = scmp.eq.s32.totalorder %s86, 0
      %s89 = sadd.s32 %s88, 1
      %s90 = scalar_select %p87, %s88, %s89
      %p93 = pneg %p87
      %p94 = scmp.eq.s32.totalorder %s12, 1
      %p95 = por %p93, %p94
      %p96 = scmp.ne.s32.totalorder %s88, %s91
      %p97 = scmp.eq.s32.totalorder %s12, 0
      %p98 = por %p96, %p97
      %p99 = scmp.ne.s32.totalorder %s88, %s91
      %p100 = scmp.eq.s32.totalorder %s17, 1
      %p101 = por %p99, %p100
      %p102 = scmp.ne.s32.totalorder %s91, %s92
      %p103 = scmp.eq.s32.totalorder %s17, 0
      %p104 = por %p102, %p103
      %p105 = scmp.ne.s32.totalorder %s91, %s92
      %p106 = scmp.eq.s32.totalorder %s18, 1
      %p107 = por %p105, %p106
      %p109 = scmp.ne.s32.totalorder %s92, %s108
      %p110 = scmp.eq.s32.totalorder %s18, 0
      %p111 = por %p109, %p110
      %s112 = ssub.s32 %s19, %s31
      %s113 = ssub.s32 %s20, %s27
      %s114 = sor.u32 %s112, %s113
      %p115 = scmp.eq.s32.totalorder %s114, 0
      %s117 = sadd.s32 %s116, 1
      %s118 = scalar_select %p115, %s116, %s117
      %p121 = pneg %p115
      %p122 = scmp.eq.s32.totalorder %s12, 1
      %p123 = por %p121, %p122
      %p124 = scmp.ne.s32.totalorder %s116, %s119
      %p125 = scmp.eq.s32.totalorder %s12, 0
      %p126 = por %p124, %p125
      %p127 = scmp.ne.s32.totalorder %s116, %s119
      %p128 = scmp.eq.s32.totalorder %s17, 1
      %p129 = por %p127, %p128
      %p130 = scmp.ne.s32.totalorder %s119, %s120
      %p131 = scmp.eq.s32.totalorder %s17, 0
      %p132 = por %p130, %p131
      %p133 = scmp.ne.s32.totalorder %s119, %s120
      %p134 = scmp.eq.s32.totalorder %s18, 1
      %p135 = por %p133, %p134
      %p137 = scmp.ne.s32.totalorder %s120, %s136
      %p138 = scmp.eq.s32.totalorder %s18, 0
      %p139 = por %p137, %p138
      %p140 = scmp.le.s32.totalorder 1, %s12
      %p141 = scmp.lt.s32.totalorder %s12, 3
      %p142 = pnand %p140, %p141
      %p143 = pneg %p142
      // Predicated region
      $region9: #{tpu_custom_call.1} parent=5 // pred_check
        _
      $region10: #{tpu_custom_call.1} parent=5 // pred_check_branch
        %145 = sbr.rel (%p142) target = $region12
      $region11: #{tpu_custom_call.1} parent=5 // pred_region
        %s146 = ssub.s32 %s12, 1
      $region12: #{tpu_custom_call.1} parent=5 // pred_fallthru
        _
      %p147 = scmp.lt.s32.totalorder %s12, 2
      // Predicated region
      $region13: #{tpu_custom_call.1} parent=5 // pred_check
        %p148 = pneg %p147
      $region14: #{tpu_custom_call.1} parent=5 // pred_check_branch
        %150 = sbr.rel (%p148) target = $region16
      $region15: #{tpu_custom_call.1} parent=5 // pred_region
        // Predicated region
        $region17: #{tpu_custom_call.1} parent=15 // pred_check
          %p151 = pneg %p46
        $region18: #{tpu_custom_call.1} parent=15 // pred_check_branch
          %153 = sbr.rel (%p151) target = $region20
        $region19: #{tpu_custom_call.1} parent=15 // pred_region
          %s154 = smul.u32 2, %s20
          %p155 = scmp.lt.s32.totalorder %s19, 1
          %s156 = scalar_select %p155, %s19, 1
          %p157 = scmp.lt.s32.totalorder %s154, 1
          %s158 = scalar_select %p157, %s154, 1
          %s159 = smul.addr %s156, 2
          %s160 = sadd.s32 %s158, %s159
          %s161 = smul.addr %s160, 8
          %s162 = scalar_lea.vmem %s0, %s161
          %s163 = smul.u32 2, %s20
        $region20: #{tpu_custom_call.1} parent=15 // pred_fallthru
          _
        // Predicated region
        $region21: #{tpu_custom_call.1} parent=15 // pred_check
          %p164 = pneg %p72
        $region22: #{tpu_custom_call.1} parent=15 // pred_check_branch
          %166 = sbr.rel (%p164) target = $region24
        $region23: #{tpu_custom_call.1} parent=15 // pred_region
          %p167 = scmp.lt.s32.totalorder %s19, 1
          %s168 = scalar_select %p167, %s19, 1
          %s169 = smul.addr %s168, 2
          %s170 = smul.addr %s169, 8
          %s171 = scalar_lea.vmem %s1, %s170
        $region24: #{tpu_custom_call.1} parent=15 // pred_fallthru
          _
        // Predicated region
        $region25: #{tpu_custom_call.1} parent=15 // pred_check
          %p172 = pneg %p98
        $region26: #{tpu_custom_call.1} parent=15 // pred_check_branch
          %174 = sbr.rel (%p172) target = $region28
        $region27: #{tpu_custom_call.1} parent=15 // pred_region
          %p175 = scmp.lt.s32.totalorder %s19, 1
          %s176 = scalar_select %p175, %s19, 1
          %s177 = scalar_lea.vmem %s2, %s176
        $region28: #{tpu_custom_call.1} parent=15 // pred_fallthru
          _
      $region16: #{tpu_custom_call.1} parent=5 // pred_fallthru
        _
      %p178 = scmp.le.s32.totalorder 1, %s12
      %p179 = scmp.lt.s32.totalorder %s12, 3
      %p180 = pnand %p178, %p179
      %p181 = pneg %p180
      // Predicated region
      $region29: #{tpu_custom_call.1} parent=5 // pred_check
        _
      $region30: #{tpu_custom_call.1} parent=5 // pred_check_branch
        %183 = sbr.rel (%p180) target = $region32
      $region31: #{tpu_custom_call.1} parent=5 // pred_region
        %s184 = ssub.s32 %s12, 1
        %s185 = smul.u32 2, %s22
        %p186 = scmp.lt.s32.totalorder %s21, 1
        %s187 = scalar_select %p186, %s21, 1
        %p188 = scmp.lt.s32.totalorder %s185, 1
        %s189 = scalar_select %p188, %s185, 1
        %s190 = smul.addr %s187, 2
        %s191 = sadd.s32 %s189, %s190
        %s192 = smul.addr %s191, 8
        %s193 = scalar_lea.vmem %s0, %s192
        %p194 = pneg %p52
        %p195 = pneg %p49
        %p196 = scmp.lt.s32.totalorder %s21, 1
        %s197 = scalar_select %p196, %s21, 1
        %s198 = smul.addr %s197, 2
        %s199 = smul.addr %s198, 8
        %s200 = scalar_lea.vmem %s1, %s199
        %p201 = pneg %p78
        %p202 = pneg %p75
        %p203 = scmp.lt.s32.totalorder %s21, 1
        %s204 = scalar_select %p203, %s21, 1
        %s205 = scalar_lea.vmem %s2, %s204
        %p206 = pneg %p104
        %p207 = pneg %p101
        %p208 = pneg %p132
        %p209 = pneg %p129
        %s210 = sand.u32 %s119, 1
        %s211 = scalar_lea.sflag [#allocation3], %s210
        %s212 = sand.u32 %s119, 1
        %s213 = smul.addr %s212, 16
        %s214 = scalar_lea.vmem [#allocation2], %s213
        %s215 = smul.u32 2, %s22
        %p216 = scmp.lt.s32.totalorder %s21, 1
        %s217 = scalar_select %p216, %s21, 1
        %p218 = scmp.lt.s32.totalorder %s215, 1
        %s219 = scalar_select %p218, %s215, 1
        %s220 = smul.addr %s217, 2
        %s221 = sadd.s32 %s219, %s220
        %s222 = smul.addr %s221, 8
        %s223 = scalar_lea.vmem %s0, %s222
        %s224 = smul.u32 2, %s22
        %p225 = scmp.lt.s32.totalorder %s21, 1
        %s226 = scalar_select %p225, %s21, 1
        %s227 = smul.addr %s226, 2
        %s228 = smul.addr %s227, 8
        %s229 = scalar_lea.vmem %s1, %s228
        %p230 = scmp.lt.s32.totalorder %s21, 1
        %s231 = scalar_select %p230, %s21, 1
        %s232 = scalar_lea.vmem %s2, %s231
        %s233 = smul.u32 2, %s22
        %v234 = vld [vmem:[%s223] sm:$0xff]
        %v235 = vld [vmem:[%s223 + $0x8] sm:$0xff]
        %v236 = vld [vmem:[%s229] sm:$0xff]
        %v237 = vld [vmem:[%s229 + $0x8] sm:$0xff]
        %vm238 = vcmask 31744
        %v240 = vsel %vm238, %v234, 0
        %v243 = vsel %vm238, %v235, 0
        %v246 = vsel %vm238, %v236, 0
        %v249 = vsel %vm238, %v237, 0
        %251 = vmatprep.subr.mxu0 0.0
        %252 = vmatpush1.xpose.msra.mxu0 %v246
        %253 = vmatprep.subr.mxu0 0.0
        %254 = vmatpush1.xpose.msra.mxu0 %v249
        %255 = vmatprep.subr.mxu0 0.0
        %256 = vmatpush1.xpose.msra.mxu0 0.0
        %257 = vmatprep.subr.mxu0 0.0
        %258 = vmatpush1.xpose.msra.mxu0 0.0
        %259 = vmatprep.subr.mxu0 0.0
        %260 = vmatpush1.xpose.msra.mxu0 0.0
        %261 = vmatprep.subr.mxu0 0.0
        %262 = vmatpush1.xpose.msra.mxu0 0.0
        %263 = vmatprep.subr.mxu0 0.0
        %264 = vmatpush1.xpose.msra.mxu0 0.0
        %265 = vmatprep.subr.mxu0 0.0
        %266 = vmatpush1.xpose.msra.mxu0 0.0
        %267 = vmatprep.subr.mxu0 0.0
        %268 = vmatpush1.xpose.msra.mxu0 0.0
        %269 = vmatprep.subr.mxu0 0.0
        %270 = vmatpush1.xpose.msra.mxu0 0.0
        %271 = vmatprep.subr.mxu0 0.0
        %272 = vmatpush1.xpose.msra.mxu0 0.0
        %273 = vmatprep.subr.mxu0 0.0
        %274 = vmatpush1.xpose.msra.mxu0 0.0
        %275 = vmatprep.subr.mxu0 0.0
        %276 = vmatpush1.xpose.msra.mxu0 0.0
        %277 = vmatprep.subr.mxu0 0.0
        %278 = vmatpush1.xpose.msra.mxu0 0.0
        %279 = vmatprep.subr.mxu0 0.0
        %280 = vmatpush1.xpose.msra.mxu0 0.0
        %281 = vmatprep.subr.mxu0 0.0
        %282 = vmatpush1.xpose.msra.mxu0 0.0
        %283 = vmatprep.subr.mxu0 0.0
        %284 = vmatpush1.xpose.msra.mxu0 0.0
        %285 = vmatprep.subr.mxu0 0.0
        %286 = vmatpush1.xpose.msra.mxu0 0.0
        %287 = vmatprep.subr.mxu0 0.0
        %288 = vmatpush1.xpose.msra.mxu0 0.0
        %289 = vmatprep.subr.mxu0 0.0
        %290 = vmatpush1.xpose.msra.mxu0 0.0
        %291 = vmatprep.subr.mxu0 0.0
        %292 = vmatpush1.xpose.msra.mxu0 0.0
        %293 = vmatprep.subr.mxu0 0.0
        %294 = vmatpush1.xpose.msra.mxu0 0.0
        %295 = vmatprep.subr.mxu0 0.0
        %296 = vmatpush1.xpose.msra.mxu0 0.0
        %297 = vmatprep.subr.mxu0 0.0
        %298 = vmatpush1.xpose.msra.mxu0 0.0
        %299 = vmatprep.subr.mxu0 0.0
        %300 = vmatpush1.xpose.msra.mxu0 0.0
        %301 = vmatprep.subr.mxu0 0.0
        %302 = vmatpush1.xpose.msra.mxu0 0.0
        %303 = vmatprep.subr.mxu0 0.0
        %304 = vmatpush1.xpose.msra.mxu0 0.0
        %305 = vmatprep.subr.mxu0 0.0
        %306 = vmatpush1.xpose.msra.mxu0 0.0
        %307 = vmatprep.subr.mxu0 0.0
        %308 = vmatpush1.xpose.msra.mxu0 0.0
        %309 = vmatprep.subr.mxu0 0.0
        %310 = vmatpush1.xpose.msra.mxu0 0.0
        %311 = vmatprep.subr.mxu0 0.0
        %312 = vmatpush1.xpose.msra.mxu0 0.0
        %313 = vmatprep.subr.mxu0 0.0
        %314 = vmatpush1.xpose.msra.mxu0 0.0
        %315 = vmatprep.mubr.f32.mxu0 0.0
        %316 = vmatmul.mubr.f32.gmra.mrb[0].mxu0 %v240
        %v317 = vpop.f32.mrb[0].mxu0
        %v318 = vadd.f32 0.0, %v317
        %v319 = vpop.f32.mrb[0].mxu0
        %320 = vmatprep.mubr.f32.mxu0 0.0
        %321 = vmatmul.mubr.f32.gmra.mrb[0].mxu0 %v243
        %v322 = vpop.f32.mrb[0].mxu0
        %v323 = vadd.f32 0.0, %v322
        %v324 = vpop.f32.mrb[0].mxu0
        %325 = vdwg.mxu0
        %v326 = vmul.f32 %v234, %v234
        %v327 = vmul.f32 %v235, %v235
        %v328 = vsel %vm238, %v326, 0.0
        %329 = vadd.xlane.f32.xlu0 %v328
        %v330 = vpop.xlane.xlu0 %329
        %v331 = vsel %vm238, %v327, 0.0
        %332 = vadd.xlane.f32.xlu0 %v331
        %v333 = vpop.xlane.xlu0 %332
        %v334 = vld [vmem:[%s232] sm:$0x1]
        %v336 = vlaneseq
        %v337 = vshrl.u32 %v336, 7
        %v338 = vsub.s32 0, %v337
        %v339 = vrot.slane %v334, %v338
        %v341 = vadd.f32 %v330, %v339
        %v342 = vadd.f32 %v333, %v339
        %v343 = vmul.f32 %v318, 2.0
        %v344 = vmul.f32 %v323, 2.0
        %v345 = vsub.f32 %v341, %v343
        %v346 = vsub.f32 %v342, %v344
        %v347 = vmax.f32 %v345, 0.0
        %v348 = vmax.f32 %v346, 0.0
        %s349 = smul.u32 %s22, 16
        %v350 = vlaneseq
        %v351 = vshrl.u32 %v350, 7
        %v352 = vadd.s32 %v351, 8
        %v353 = vstv %s349
        %v354 = vadd.s32 %v353, %v351
        %v355 = vadd.s32 %v353, %v352
        %v356 = vlaneseq
        %v357 = vand.u32 %v356, 127
        %vm358 = vcmp.eq.s32.totalorder %v354, %v357
        %vm359 = vcmp.eq.s32.totalorder %v355, %v357
        %v360 = vsel %vm358, 1e+09, %v347
        %v361 = vsel %vm359, 1e+09, %v348
        %vm362 = vcmask 130048
        %363 = vst.msk [vmem:[%s214] sm:$0xff] %vm362, %v360
        %364 = vst.msk [vmem:[%s214 + $0x8] sm:$0xff] %vm362, %v361
        %s365 = sand.u32 %s119, 1
        %s366 = scalar_lea.sflag [#allocation3], %s365
        %s367 = sand.u32 %s119, 1
        %s368 = smul.addr %s367, 16
        %s369 = scalar_lea.vmem [#allocation2], %s368
        // Predicated region
        $region33: #{tpu_custom_call.1} parent=31 // pred_check
          %p370 = pneg %p129
        $region34: #{tpu_custom_call.1} parent=31 // pred_check_branch
          %372 = sbr.rel (%p370) target = $region36
        $region35: #{tpu_custom_call.1} parent=31 // pred_region
          %s373 = smul.u32 2, %s22
          %s375 = ssub.s32 256, 256
          %376 = vsyncadd %s366, %s375
          %s377 = smul.addr %s21, 2
          %s378 = sadd.s32 %s373, %s377
          %s379 = smul.addr %s378, 128
          %s380 = scalar_lea.hbm %s3, %s379
          %s381 = sshll.u32 %s369, 4
          %s382 = int_to_ptr.vmem [resolvable:$true] %s381
          %387 = dma.vmem_to_hbm [thread:$0]  %s382, 256, %s380, %s366, 128, 128, 8
        $region36: #{tpu_custom_call.1} parent=31 // pred_fallthru
          _
      $region32: #{tpu_custom_call.1} parent=5 // pred_fallthru
        _
      %p388 = scmp.le.s32.totalorder 2, %s12
      // Predicated region
      $region37: #{tpu_custom_call.1} parent=5 // pred_check
        %p389 = pneg %p388
      $region38: #{tpu_custom_call.1} parent=5 // pred_check_branch
        %391 = sbr.rel (%p389) target = $region40
      $region39: #{tpu_custom_call.1} parent=5 // pred_region
        %s392 = ssub.s32 %s12, 2
        // Predicated region
        $region41: #{tpu_custom_call.1} parent=39 // pred_check
          %p393 = pneg %p135
        $region42: #{tpu_custom_call.1} parent=39 // pred_check_branch
          %395 = sbr.rel (%p393) target = $region44
        $region43: #{tpu_custom_call.1} parent=39 // pred_region
          %s396 = sand.u32 %s120, 1
          %s397 = scalar_lea.sflag [#allocation3], %s396
          %s398 = sand.u32 %s120, 1
          %s399 = smul.addr %s398, 16
          %s400 = scalar_lea.vmem [#allocation2], %s399
          %401 = dma.done %s397, 256
        $region44: #{tpu_custom_call.1} parent=39 // pred_fallthru
          _
      $region40: #{tpu_custom_call.1} parent=5 // pred_fallthru
        _
    $region6: #{tpu_custom_call.1} parent=1 // loop_footer
      %s16 = sadd.s32 1, %s12
    $region7: #{tpu_custom_call.1} parent=1 // loop_footer_branch
      %11 = sbr.rel target = $region3
    $region8: #{tpu_custom_call.1} parent=1 // loop_exit
      _
    %402 = vsyncpa [#allocation3], 1
    %s403 = scalar_lea.sflag [#allocation3], 1
    %404 = vsyncpa %s403, 1

</llo_original>
